<compile_context>
chip_gen: v5e
topology: v5e:2x2
jax: 0.10.0
libtpu: 0.0.40
codegen_flags: <defaults>
</compile_context>

<pallas_src>
import jax
import jax.numpy as jnp
from jax import lax
from jax.experimental import pallas as pl
from jax.experimental.pallas import tpu as pltpu


def _linear_permuted_kernel(x_ref, w_ref, b_ref, o_ref):
    # x_ref: (1, ts, D)   w_ref: (to, D)   b_ref: (to, 1)   o_ref: (1, to, ts)
    x = x_ref[0]                      # (ts, D)
    w = w_ref[...]                    # (to, D)
    # Contract the last (D) dim of both operands: (to, D) . (ts, D) -> (to, ts).
    # MXU-native, no transpose on load or store, and the result is already in
    # the permuted (out_features, seq) layout -> lane dim is the seq tile.
    y = lax.dot_general(
        w, x,
        dimension_numbers=(((1,), (1,)), ((), ())),
        preferred_element_type=jnp.float32,
    )
    y = y + b_ref[...]                # bias column broadcast over seq lanes, f32
    o_ref[0] = y.astype(o_ref.dtype)


def _pick_tile(dim, target, align):
    """Full-dim block only when the dim is small; otherwise an aligned,
    bounded tile (grid uses cdiv, Pallas masks the ragged tail)."""
    if dim <= target:
        return dim
    return max((target // align) * align, align)


def linear_permuted_pallas(x, w, b):
    """Pallas path: y[b, o, s] = sum_d x[b, s, d] * w[o, d] + b[o]."""
    B, S, D = x.shape
    O = w.shape[0]
    bcol = b.reshape(O, 1)

    ts = _pick_tile(S, 512, 128)   # lane tile of the output / sublane tile of x
    to = _pick_tile(O, 256, 8)     # sublane tile of the output / weight rows
    # TODO(synk): if D ever grows beyond a few hundred, add a K grid axis
    # (tk ~ 256-512, "arbitrary") with a VMEM f32 accumulator instead of
    # contracting the full D in one shot.

    itemsize = jnp.dtype(x.dtype).itemsize
    block_bytes = (ts * D + to * D + to + to * ts) * max(itemsize, 4)
    vmem_limit = int(min(max(4 * block_bytes, 16 << 20), 100 << 20))

    return pl.pallas_call(
        _linear_permuted_kernel,
        out_shape=jax.ShapeDtypeStruct((B, O, S), x.dtype),
        grid_spec=pltpu.PrefetchScalarGridSpec(
            num_scalar_prefetch=0,
            # oi before si: weight/bias blocks are invariant along the
            # innermost axis, so they stay resident while x streams.
            grid=(B, pl.cdiv(O, to), pl.cdiv(S, ts)),
            in_specs=[
                pl.BlockSpec((1, ts, D), lambda bi, oi, si: (bi, si, 0)),
                pl.BlockSpec((to, D), lambda bi, oi, si: (oi, 0)),
                pl.BlockSpec((to, 1), lambda bi, oi, si: (oi, 0)),
            ],
            out_specs=pl.BlockSpec((1, to, ts), lambda bi, oi, si: (bi, oi, si)),
        ),
        compiler_params=pltpu.CompilerParams(
            dimension_semantics=("parallel", "parallel", "parallel"),
            vmem_limit_bytes=vmem_limit,
        ),
    )(x, w, bcol)


def model_forward(x, w, b, *, force_pallas=False):
    """Matches Model.forward: Linear(x) then permute(0, 2, 1).

    For tiny workloads (like the module's (1, 2, 2) input) a Pallas call is
    100% dispatch/pipeline overhead, so by default we let XLA fuse a plain
    dot + bias + transpose; the Pallas kernel is used when the problem is big
    enough to amortize per-step overhead, or when forced.
    """
    B, S, D = x.shape
    O = w.shape[0]
    tiny = (B * S * O * D) < (128 * 128 * 8)
    if tiny and not force_pallas:
        y = jnp.einsum("bsd,od->bso", x, w,
                       preferred_element_type=jnp.float32) + b
        return jnp.transpose(y.astype(x.dtype), (0, 2, 1))
    return linear_permuted_pallas(x, w, b)


if __name__ == "__main__":
    key = jax.random.PRNGKey(0)
    kx, kw, kb = jax.random.split(key, 3)

    # Input consistent with the module: x1 = torch.randn(1, 2, 2)
    x = jax.random.normal(kx, (1, 2, 2), dtype=jnp.float32)

    # Deterministic Linear(2, 2) parameters (torch-style uniform init bound).
    in_features, out_features = 2, 2
    bound = 1.0 / (in_features ** 0.5)
    w = jax.random.uniform(kw, (out_features, in_features),
                           dtype=jnp.float32, minval=-bound, maxval=bound)
    b = jax.random.uniform(kb, (out_features,),
                           dtype=jnp.float32, minval=-bound, maxval=bound)

    # Plain-JAX reference of the PyTorch forward.
    ref = jnp.transpose(jnp.einsum("bsd,od->bso", x, w) + b, (0, 2, 1))

    # 1) Run the Pallas kernel once (permute fused into the kernel).
    out_pallas = jax.block_until_ready(model_forward(x, w, b, force_pallas=True))
    assert out_pallas.shape == (1, 2, 2)
    assert jnp.allclose(out_pallas, ref, atol=1e-5, rtol=1e-5)

    # 2) Default path (XLA fallback for this overhead-bound tiny shape).
    out_default = jax.block_until_ready(model_forward(x, w, b))
    assert jnp.allclose(out_default, ref, atol=1e-5, rtol=1e-5)

    print("KERNEL_OK")
</pallas_src>

<mosaic_0001>
module attributes {stable_mosaic.version = 11 : i64} {
  func.func @_linear_permuted_kernel(%arg0: i32, %arg1: i32, %arg2: i32, %arg3: memref<1x2x2xf32, #tpu.memory_space<vmem>>, %arg4: memref<2x2xf32, #tpu.memory_space<vmem>>, %arg5: memref<2x1xf32, #tpu.memory_space<vmem>>, %arg6: memref<1x2x2xf32, #tpu.memory_space<vmem>>) attributes {dimension_semantics = [#tpu.dimension_semantics<parallel>, #tpu.dimension_semantics<parallel>, #tpu.dimension_semantics<parallel>], iteration_bounds = array<i64: 1, 1, 1>, scalar_prefetch = 0 : i64, scratch_operands = 0 : i64, tpu.core_type = #tpu.core_type<tc>, window_params = [{transform_indices = @transform_0, window_bounds = array<i64: 1, 2, 2>}, {transform_indices = @transform_1, window_bounds = array<i64: 2, 2>}, {transform_indices = @transform_2, window_bounds = array<i64: 2, 1>}, {transform_indices = @transform_3, window_bounds = array<i64: 1, 2, 2>}]} {
    %c0 = arith.constant 0 : index
    %c0_0 = arith.constant 0 : index
    %c0_1 = arith.constant 0 : index
    %0 = vector.load %arg3[%c0, %c0_0, %c0_1] : memref<1x2x2xf32, #tpu.memory_space<vmem>>, vector<1x2x2xf32>
    %1 = vector.shape_cast %0 : vector<1x2x2xf32> to vector<2x2xf32>
    %c0_2 = arith.constant 0 : index
    %c0_3 = arith.constant 0 : index
    %2 = vector.load %arg4[%c0_2, %c0_3] : memref<2x2xf32, #tpu.memory_space<vmem>>, vector<2x2xf32>
    %cst = arith.constant dense<0.000000e+00> : vector<2x2xf32>
    %3 = tpu.matmul %2, %1, %cst {dimension_numbers = #tpu.dot_dimension_numbers<[1], [1], [0], [0], [0, 0, 1, 0], [], []>} : vector<2x2xf32>, vector<2x2xf32>, vector<2x2xf32> -> vector<2x2xf32>
    %c0_4 = arith.constant 0 : index
    %c0_5 = arith.constant 0 : index
    %4 = vector.load %arg5[%c0_4, %c0_5] : memref<2x1xf32, #tpu.memory_space<vmem>>, vector<2x1xf32>
    %5 = vector.broadcast %4 : vector<2x1xf32> to vector<2x2xf32>
    %6 = arith.addf %3, %5 : vector<2x2xf32>
    %c0_6 = arith.constant 0 : index
    %c0_7 = arith.constant 0 : index
    %c0_8 = arith.constant 0 : index
    %7 = vector.load %arg6[%c0_6, %c0_7, %c0_8] : memref<1x2x2xf32, #tpu.memory_space<vmem>>, vector<1x2x2xf32>
    %8 = vector.shape_cast %7 : vector<1x2x2xf32> to vector<2x2xf32>
    %9 = vector.shape_cast %6 : vector<2x2xf32> to vector<1x2x2xf32>
    tpu.vector_store %arg6[%c0_6, %c0_7, %c0_8], %9 {strides = array<i32>} : memref<1x2x2xf32, #tpu.memory_space<vmem>>, vector<1x2x2xf32>,
    return
  }
  func.func @transform_0(%arg0: i32, %arg1: i32, %arg2: i32) -> (i32, i32, i32) {
    %c0_i32 = arith.constant 0 : i32
    %c0_i32_0 = arith.constant 0 : i32
    return %arg0, %arg2, %c0_i32 : i32, i32, i32
  }
  func.func @transform_1(%arg0: i32, %arg1: i32, %arg2: i32) -> (i32, i32) {
    %c0_i32 = arith.constant 0 : i32
    %c0_i32_0 = arith.constant 0 : i32
    return %arg1, %c0_i32 : i32, i32
  }
  func.func @transform_2(%arg0: i32, %arg1: i32, %arg2: i32) -> (i32, i32) {
    %c0_i32 = arith.constant 0 : i32
    %c0_i32_0 = arith.constant 0 : i32
    return %arg1, %c0_i32 : i32, i32
  }
  func.func @transform_3(%arg0: i32, %arg1: i32, %arg2: i32) -> (i32, i32, i32) {
    %c0_i32 = arith.constant 0 : i32
    return %arg0, %arg1, %arg2 : i32, i32, i32
  }
}

</mosaic_0001>

<llo_original>
// kernel: tpu_custom_call.1
$region0: #{tpu_custom_call.1}
  #allocation0 [shape = 'u32[]', space=smem, size = 0x4, offset = 0x4, fixed_abs, tag = 'smem constant byte address 0x4 - core index']
  #allocation1 [shape = 'u32[72,128]{1,0:T(1,128)}', space=vmem, size = 0x9000, scoped, tag = 'internal scratch']
  %s0 = inlined_call_operand.vmem [shape: f32[1,2,2], index: 0, kind: input, shape index: {}]
  %s1 = inlined_call_operand.hbm [shape: f32[2,2], index: 1, kind: input, shape index: {}]
  %s2 = inlined_call_operand.vmem [shape: f32[2,1], index: 2, kind: input, shape index: {}]
  %s3 = inlined_call_operand.hbm [shape: f32[1,2,2], index: 3, kind: output, shape index: {}]
  %s4 = sld [smem:[#allocation0]]
  $region26: #{tpu_custom_call.1} parent=0
    _
  %s6 = ssub.s32 1, %s4
  %s7 = scalar_select 0, %s6, %s4
  $region1: #{tpu_custom_call.1} parent=0
    #allocation2 [shape = 'u8[1024]{0}', space=vmem, size = 0x400, scoped, tag = 'input window, operand 1, single buffered']
    #allocation3 [shape = 's32[1]{0}', space=sflag, size = 0x4, scoped, tag = 'scoped memory for tpu_custom_call.1']
    #allocation4 [shape = 's32[1]{0}', space=sflag, size = 0x4, scoped, tag = 'scoped memory for tpu_custom_call.1']
    #allocation5 [shape = 'u8[1024]{0}', space=vmem, size = 0x400, scoped, tag = 'output window, operand 0, single buffered']
    %8 = vsyncpa [#allocation3], 0
    %9 = vsyncpa [#allocation4], 0
    // Predicated region
    $region2: #{tpu_custom_call.1} parent=1 // pred_check
      _
    $region3: #{tpu_custom_call.1} parent=1 // pred_check_branch
      %11 = sbr.rel (0) target = $region5
    $region4: #{tpu_custom_call.1} parent=1 // pred_region
      _
    $region5: #{tpu_custom_call.1} parent=1 // pred_fallthru
      _
    // Predicated region
    $region6: #{tpu_custom_call.1} parent=1 // pred_check
      _
    $region7: #{tpu_custom_call.1} parent=1 // pred_check_branch
      %13 = sbr.rel (0) target = $region9
    $region8: #{tpu_custom_call.1} parent=1 // pred_region
      %15 = vsyncadd [#allocation3], 0
      %s17 = sshll.u32 %s1, 4
      %s18 = int_to_ptr.hbm [resolvable:$true] %s17
      %s19 = sshll.u32 [#allocation2], 4
      %s20 = int_to_ptr.vmem [resolvable:$true] %s19
      %22 = dma.hbm_to_vmem [thread:$0]  %s18, 32, %s20, [#allocation3]
    $region9: #{tpu_custom_call.1} parent=1 // pred_fallthru
      _
    // Predicated region
    $region10: #{tpu_custom_call.1} parent=1 // pred_check
      _
    $region11: #{tpu_custom_call.1} parent=1 // pred_check_branch
      %24 = sbr.rel (0) target = $region13
    $region12: #{tpu_custom_call.1} parent=1 // pred_region
      _
    $region13: #{tpu_custom_call.1} parent=1 // pred_fallthru
      _
    // Predicated region
    $region14: #{tpu_custom_call.1} parent=1 // pred_check
      _
    $region15: #{tpu_custom_call.1} parent=1 // pred_check_branch
      %26 = sbr.rel (0) target = $region17
    $region16: #{tpu_custom_call.1} parent=1 // pred_region
      %28 = dma.done [#allocation3], 32
    $region17: #{tpu_custom_call.1} parent=1 // pred_fallthru
      _
    %v29 = vld [vmem:[%s0] sm:$0x3]
    %v30 = vld [vmem:[#allocation2] sm:$0x3]
    %v31 = vld [vmem:[%s2] sm:$0x3]
    %33 = vset.pattern.permute.xlu0 0
    %34 = vperm.xlu0 %33, %v31
    %v35 = vpop.permute.xlu0 %34
    %vm37 = vcmask 15360
    %v39 = vsel %vm37, %v30, 0
    %v42 = vsel %vm37, %v29, 0
    %44 = vmatpush.xpose.msra.mxu0 0.0
    %45 = vmatpush.xpose.msra.mxu0 0.0
    %46 = vmatpush.xpose.msra.mxu0 0.0
    %47 = vmatpush.xpose.msra.mxu0 0.0
    %48 = vmatpush.xpose.msra.mxu0 0.0
    %49 = vmatpush.xpose.msra.mxu0 0.0
    %50 = vmatpush.xpose.msra.mxu0 0.0
    %51 = vmatpush.xpose.msra.mxu0 0.0
    %52 = vmatpush.xpose.msra.mxu0 0.0
    %53 = vmatpush.xpose.msra.mxu0 0.0
    %54 = vmatpush.xpose.msra.mxu0 0.0
    %55 = vmatpush.xpose.msra.mxu0 0.0
    %56 = vmatpush.xpose.msra.mxu0 0.0
    %57 = vmatpush.xpose.msra.mxu0 0.0
    %58 = vmatpush.xpose.msra.mxu0 0.0
    %59 = vmatpush.xpose.msra.mxu0 %v42
    %60 = vmatmul.f32.gmra.mxu0 %v39
    %v61 = vpop.f32.mrf.mxu0
    %v62 = vadd.f32 %v35, %v61
    %63 = vdwg.mxu0
    %vm64 = vcmask 9216
    %65 = vst.msk [vmem:[#allocation5] sm:$0x3] %vm64, %v62
    // Predicated region
    $region18: #{tpu_custom_call.1} parent=1 // pred_check
      _
    $region19: #{tpu_custom_call.1} parent=1 // pred_check_branch
      %67 = sbr.rel (0) target = $region21
    $region20: #{tpu_custom_call.1} parent=1 // pred_region
      %69 = vsyncadd [#allocation4], 0
      %s71 = sshll.u32 [#allocation5], 4
      %s72 = int_to_ptr.vmem [resolvable:$true] %s71
      %s73 = sshll.u32 %s3, 4
      %s74 = int_to_ptr.hbm [resolvable:$true] %s73
      %76 = dma.vmem_to_hbm [thread:$0]  %s72, 32, %s74, [#allocation4]
    $region21: #{tpu_custom_call.1} parent=1 // pred_fallthru
      _
    // Predicated region
    $region22: #{tpu_custom_call.1} parent=1 // pred_check
      _
    $region23: #{tpu_custom_call.1} parent=1 // pred_check_branch
      %78 = sbr.rel (0) target = $region25
    $region24: #{tpu_custom_call.1} parent=1 // pred_region
      %80 = dma.done [#allocation4], 32
    $region25: #{tpu_custom_call.1} parent=1 // pred_fallthru
      _
    %81 = vsyncpa [#allocation3], 1
    %82 = vsyncpa [#allocation4], 1

</llo_original>
